<compile_context>
chip_gen: v5e
topology: v5e:2x2
jax: 0.10.0
libtpu: 0.0.40
codegen_flags: <defaults>
</compile_context>

<pallas_src>
import jax
import jax.numpy as jnp
from jax.experimental import pallas as pl
from jax.experimental.pallas import tpu as pltpu

_LANES = 128
_SUBLANES = 8
_MAX_TILE_ROWS = 1024            # 1024 x 128 f32 = 512 KiB per block
_MIN_TILE_ROWS = 128             # don't accept pathologically tiny exact tiles
_SMALL_MAX_BYTES = 2 * 1024 * 1024   # whole-array-in-VMEM fused path


def _fused_small_kernel(x_ref, o_ref, sum_smem):
    """Whole array resident in VMEM: sum -> predicate -> branch, one kernel."""
    x = x_ref[...]
    sum_smem[0] = jnp.sum(x.astype(jnp.float32))

    @pl.when(sum_smem[0] > 4.0)
    def _true():
        o_ref[...] = x + x

    @pl.when(sum_smem[0] <= 4.0)
    def _false():
        o_ref[...] = x * x


def _fused_tiled_kernel(x_ref, o_ref, acc_ref, sum_smem):
    """grid = (2, num_tiles). Phase 0: accumulate the sum; phase 1: apply the branch."""
    phase = pl.program_id(0)
    i = pl.program_id(1)

    @pl.when(phase == 0)
    def _reduce():
        @pl.when(i == 0)
        def _init():
            acc_ref[...] = jnp.zeros_like(acc_ref)

        # Pure-VPU accumulation into an (8, 128) f32 vector accumulator; the
        # reshape is layout-preserving (splits the sublane axis only).
        x = x_ref[...].astype(jnp.float32)
        acc_ref[...] += jnp.sum(x.reshape(-1, _SUBLANES, _LANES), axis=0)

        @pl.when(i == pl.num_programs(1) - 1)
        def _finalize():
            sum_smem[0] = jnp.sum(acc_ref[...])  # single cross-lane reduce

    @pl.when(phase == 1)
    def _select():
        x = x_ref[...]
        pred = sum_smem[0] > 4.0

        @pl.when(pred)
        def _true():
            o_ref[...] = x + x

        @pl.when(jnp.logical_not(pred))
        def _false():
            o_ref[...] = x * x


def _sublane_multiple(dtype) -> int:
    # f32 -> 8 sublanes per vreg, bf16 -> 16, int8/fp8 -> 32.
    return max(_SUBLANES, 32 // max(1, jnp.dtype(dtype).itemsize))


def _pick_tile_rows(rows: int, mult: int):
    """Largest multiple of `mult` (<= _MAX_TILE_ROWS, >= _MIN_TILE_ROWS) dividing rows."""
    t = min(_MAX_TILE_ROWS, rows)
    t -= t % mult
    lo = max(_MIN_TILE_ROWS, mult)
    while t >= lo:
        if rows % t == 0:
            return t
        t -= mult
    return None


def ftcond_basic(inp: jax.Array) -> jax.Array:
    """torch.cond(inp.sum() > 4, lambda x: x + x, lambda x: x * x, [inp])."""
    orig_shape = inp.shape
    dtype = inp.dtype
    flat = inp.reshape(-1)
    n = flat.shape[0]
    itemsize = jnp.dtype(dtype).itemsize

    # ---------- Small path: whole array fits comfortably in VMEM ----------
    if n * itemsize <= _SMALL_MAX_BYTES and (n % _LANES == 0 or n <= 8 * _LANES):
        if n % _LANES == 0:
            x2 = flat.reshape(n // _LANES, _LANES)   # free reshape, lane-dense
        else:
            x2 = flat.reshape(1, n)                  # tiny input, full-array block
        out = pl.pallas_call(
            _fused_small_kernel,
            out_shape=jax.ShapeDtypeStruct(x2.shape, dtype),
            in_specs=[pl.BlockSpec(memory_space=pltpu.MemorySpace.VMEM)],
            out_specs=pl.BlockSpec(memory_space=pltpu.MemorySpace.VMEM),
            scratch_shapes=[pltpu.SMEM((1,), jnp.float32)],
        )(x2)
        return out.reshape(orig_shape)

    # ---------- Large path: single fused 2-phase tiled kernel ----------
    mult = _sublane_multiple(dtype)
    rows_min = pl.cdiv(n, _LANES)
    tile_rows = _pick_tile_rows(rows_min, mult) if n % _LANES == 0 else None

    if tile_rows is not None:
        rows = rows_min
        x2d = flat.reshape(rows, _LANES)             # free: no HBM copy
        padded = False
    else:
        # TODO(synk): handle the ragged tail in-kernel (masked pltpu.store)
        # instead of materializing a padded copy.
        tile_rows = min(_MAX_TILE_ROWS, pl.cdiv(rows_min, mult) * mult)
        rows = pl.cdiv(rows_min, tile_rows) * tile_rows
        # Zero padding is sum-neutral and produces 0 under both branches; the
        # padded tail is sliced off below.
        x2d = jnp.pad(flat, (0, rows * _LANES - n)).reshape(rows, _LANES)
        padded = True

    num_tiles = rows // tile_rows

    out2d = pl.pallas_call(
        _fused_tiled_kernel,
        out_shape=jax.ShapeDtypeStruct((rows, _LANES), dtype),
        grid=(2, num_tiles),
        in_specs=[pl.BlockSpec((tile_rows, _LANES), lambda p, i: (i, 0))],
        # During phase 0 the output block index stays at 0 and the kernel never
        # writes it, so only phase-1 (correct) data ever reaches HBM.
        out_specs=pl.BlockSpec((tile_rows, _LANES), lambda p, i: (i * p, 0)),
        scratch_shapes=[
            pltpu.VMEM((_SUBLANES, _LANES), jnp.float32),  # vector accumulator
            pltpu.SMEM((1,), jnp.float32),                 # global sum / predicate
        ],
        # Phase axis must complete before the select phase, and the single
        # accumulator requires one core to see every tile -> both "arbitrary".
        # TODO(synk): on v7x, split phase 0 across both TensorCores
        # (CORE_PARALLEL partial sums) and combine before phase 1.
        compiler_params=pltpu.CompilerParams(
            dimension_semantics=("arbitrary", "arbitrary")),
    )(x2d)

    out_flat = out2d.reshape(-1)
    if padded:
        out_flat = out_flat[:n]
    return out_flat.reshape(orig_shape)


if __name__ == "__main__":
    key = jax.random.PRNGKey(0)
    # Matches FTCondBasic.get_random_inputs(): inp = torch.rand(5)
    inp = jax.random.uniform(key, (5,), dtype=jnp.float32)

    out = jax.block_until_ready(ftcond_basic(inp))
    ref = jnp.where(inp.sum() > 4.0, inp + inp, inp * inp)
    assert out.shape == inp.shape and out.dtype == inp.dtype
    assert jnp.allclose(out, ref, atol=1e-6), "mismatch vs reference"

    # Deterministically exercise both branches on the module-sized input.
    for t in (inp + 1.0, inp * 0.1):   # sum > 4 -> x + x ; sum < 4 -> x * x
        o = jax.block_until_ready(ftcond_basic(t))
        r = jnp.where(t.sum() > 4.0, t + t, t * t)
        assert jnp.allclose(o, r, atol=1e-6), "branch mismatch vs reference"

    # Exercise the fused tiled (large) path on both branches: 8192 x 128 f32 = 4 MiB.
    base = jax.random.uniform(jax.random.PRNGKey(1), (8192 * 128,), dtype=jnp.float32)
    for t in (base + 0.1, base - 0.6):
        o = jax.block_until_ready(ftcond_basic(t))
        r = jnp.where(t.sum() > 4.0, t + t, t * t)
        assert jnp.allclose(o, r, atol=1e-6), "tiled-path mismatch vs reference"

    print("KERNEL_OK")
</pallas_src>

<mosaic_0001>
module attributes {stable_mosaic.version = 11 : i64} {
  func.func @_fused_small_kernel(%arg0: memref<1x5xf32, #tpu.memory_space<vmem>>, %arg1: memref<1x5xf32, #tpu.memory_space<vmem>>, %arg2: memref<1xf32, #tpu.memory_space<smem>>) attributes {dimension_semantics = [], scalar_prefetch = 0 : i64, scratch_operands = 1 : i64, tpu.core_type = #tpu.core_type<tc>} {
    %c0 = arith.constant 0 : index
    %c0_0 = arith.constant 0 : index
    %0 = vector.load %arg0[%c0, %c0_0] : memref<1x5xf32, #tpu.memory_space<vmem>>, vector<1x5xf32>
    %1 = vector.shape_cast %0 : vector<1x5xf32> to vector<1x1x5xf32>
    %cst = arith.constant dense<0.000000e+00> : vector<1xf32>
    %2 = vector.multi_reduction <add>, %1, %cst [1, 2] : vector<1x1x5xf32> to vector<1xf32>
    %3 = vector.shape_cast %2 : vector<1xf32> to vector<1x1x1xf32>
    %4 = vector.extract %3[0, 0, 0] : f32 from vector<1x1x1xf32>
    %c0_1 = arith.constant 0 : index
    %5 = memref.load %arg2[%c0_1] : memref<1xf32, #tpu.memory_space<smem>>
    memref.store %4, %arg2[%c0_1] : memref<1xf32, #tpu.memory_space<smem>>
    %c0_2 = arith.constant 0 : index
    %6 = memref.load %arg2[%c0_2] : memref<1xf32, #tpu.memory_space<smem>>
    %cst_3 = arith.constant 4.000000e+00 : f32
    %7 = arith.cmpf ogt, %6, %cst_3 : f32
    %8 = arith.extui %7 : i1 to i32
    %c0_i32 = arith.constant 0 : i32
    %9 = arith.cmpi ne, %8, %c0_i32 : i32
    scf.if %9 {
      %14 = arith.addf %0, %0 : vector<1x5xf32>
      %c0_7 = arith.constant 0 : index
      %c0_8 = arith.constant 0 : index
      %15 = vector.load %arg1[%c0_7, %c0_8] : memref<1x5xf32, #tpu.memory_space<vmem>>, vector<1x5xf32>
      tpu.vector_store %arg1[%c0_7, %c0_8], %14 {strides = array<i32>} : memref<1x5xf32, #tpu.memory_space<vmem>>, vector<1x5xf32>,
    } else {
    }
    %c0_4 = arith.constant 0 : index
    %10 = memref.load %arg2[%c0_4] : memref<1xf32, #tpu.memory_space<smem>>
    %cst_5 = arith.constant 4.000000e+00 : f32
    %11 = arith.cmpf ole, %10, %cst_5 : f32
    %12 = arith.extui %11 : i1 to i32
    %c0_i32_6 = arith.constant 0 : i32
    %13 = arith.cmpi ne, %12, %c0_i32_6 : i32
    scf.if %13 {
      %14 = arith.mulf %0, %0 : vector<1x5xf32>
      %c0_7 = arith.constant 0 : index
      %c0_8 = arith.constant 0 : index
      %15 = vector.load %arg1[%c0_7, %c0_8] : memref<1x5xf32, #tpu.memory_space<vmem>>, vector<1x5xf32>
      tpu.vector_store %arg1[%c0_7, %c0_8], %14 {strides = array<i32>} : memref<1x5xf32, #tpu.memory_space<vmem>>, vector<1x5xf32>,
    } else {
    }
    return
  }
}

</mosaic_0001>

<llo_original>
// kernel: tpu_custom_call.1
$region0: #{tpu_custom_call.1}
  #allocation0 [shape = 'u32[]', space=smem, size = 0x4, offset = 0x4, fixed_abs, tag = 'smem constant byte address 0x4 - core index']
  #allocation1 [shape = 'u32[72,128]{1,0:T(1,128)}', space=vmem, size = 0x9000, scoped, tag = 'internal scratch']
  #allocation2 [shape = 'f32[1]{0:T(128)}', space=smem, size = 0x200, scoped, tag = 'scratch operand']
  %s0 = inlined_call_operand.hbm [shape: f32[1,5], index: 0, kind: input, shape index: {}]
  %s1 = inlined_call_operand.hbm [shape: f32[1,5], index: 1, kind: output, shape index: {}]
  %s2 = sld [smem:[#allocation0]]
  $region26: #{tpu_custom_call.1} parent=0
    _
  %s4 = ssub.s32 1, %s2
  %s5 = scalar_select 0, %s4, %s2
  $region1: #{tpu_custom_call.1} parent=0
    #allocation3 [shape = 'u8[512]{0}', space=vmem, size = 0x400, scoped, tag = 'input window, operand 0, single buffered']
    #allocation4 [shape = 's32[1]{0}', space=sflag, size = 0x4, scoped, tag = 'scoped memory for tpu_custom_call.1']
    #allocation5 [shape = 's32[1]{0}', space=sflag, size = 0x4, scoped, tag = 'scoped memory for tpu_custom_call.1']
    #allocation6 [shape = 'u8[512]{0}', space=vmem, size = 0x400, scoped, tag = 'output window, operand 0, single buffered']
    %6 = vsyncpa [#allocation4], 0
    %7 = vsyncpa [#allocation5], 0
    // Predicated region
    $region2: #{tpu_custom_call.1} parent=1 // pred_check
      _
    $region3: #{tpu_custom_call.1} parent=1 // pred_check_branch
      %9 = sbr.rel (0) target = $region5
    $region4: #{tpu_custom_call.1} parent=1 // pred_region
      %11 = vsyncadd [#allocation4], 0
      %s13 = sshll.u32 %s0, 4
      %s14 = int_to_ptr.hbm [resolvable:$true] %s13
      %s15 = sshll.u32 [#allocation3], 4
      %s16 = int_to_ptr.vmem [resolvable:$true] %s15
      %18 = dma.hbm_to_vmem [thread:$0]  %s14, 16, %s16, [#allocation4]
    $region5: #{tpu_custom_call.1} parent=1 // pred_fallthru
      _
    // Predicated region
    $region6: #{tpu_custom_call.1} parent=1 // pred_check
      _
    $region7: #{tpu_custom_call.1} parent=1 // pred_check_branch
      %20 = sbr.rel (0) target = $region9
    $region8: #{tpu_custom_call.1} parent=1 // pred_region
      %22 = dma.done [#allocation4], 16
    $region9: #{tpu_custom_call.1} parent=1 // pred_fallthru
      _
    %v23 = vld [vmem:[#allocation3] sm:$0x1]
    %vm24 = vcmask 32768
    %v25 = vsel %vm24, %v23, 0.0
    %26 = vadd.xlane.f32.xlu0 %v25
    %v27 = vpop.xlane.xlu0 %26
    %v28 = vrot.slane %v27, 4
    %v29 = vadd.f32 %v27, %v28
    %v30 = vrot.slane %v29, 2
    %v31 = vadd.f32 %v29, %v30
    %v32 = vrot.slane %v31, 1
    %v33 = vadd.f32 %v31, %v32
    %s34 = vtos %v33
    %s35 = scalar_lea.smem [#allocation2], 0
    %36 = sst [smem:[%s35]] %s34
    %s37 = sld [smem:[#allocation2]]
    %p38 = scmp.gt.f32.partialorder %s37, 4.0
    // Predicated region
    $region10: #{tpu_custom_call.1} parent=1 // pred_check
      %p39 = pneg %p38
    $region11: #{tpu_custom_call.1} parent=1 // pred_check_branch
      %41 = sbr.rel (%p39) target = $region13
    $region12: #{tpu_custom_call.1} parent=1 // pred_region
      %v42 = vadd.f32 %v23, %v23
      %43 = vst.msk [vmem:[#allocation6] sm:$0x1] %vm24, %v42
    $region13: #{tpu_custom_call.1} parent=1 // pred_fallthru
      _
    %s44 = sld [smem:[#allocation2]]
    %p45 = scmp.le.f32.partialorder %s44, 4.0
    // Predicated region
    $region14: #{tpu_custom_call.1} parent=1 // pred_check
      %p46 = pneg %p45
    $region15: #{tpu_custom_call.1} parent=1 // pred_check_branch
      %48 = sbr.rel (%p46) target = $region17
    $region16: #{tpu_custom_call.1} parent=1 // pred_region
      %v49 = vmul.f32 %v23, %v23
      %50 = vst.msk [vmem:[#allocation6] sm:$0x1] %vm24, %v49
    $region17: #{tpu_custom_call.1} parent=1 // pred_fallthru
      _
    // Predicated region
    $region18: #{tpu_custom_call.1} parent=1 // pred_check
      _
    $region19: #{tpu_custom_call.1} parent=1 // pred_check_branch
      %52 = sbr.rel (0) target = $region21
    $region20: #{tpu_custom_call.1} parent=1 // pred_region
      %54 = vsyncadd [#allocation5], 0
      %s56 = sshll.u32 [#allocation6], 4
      %s57 = int_to_ptr.vmem [resolvable:$true] %s56
      %s58 = sshll.u32 %s1, 4
      %s59 = int_to_ptr.hbm [resolvable:$true] %s58
      %61 = dma.vmem_to_hbm [thread:$0]  %s57, 16, %s59, [#allocation5]
    $region21: #{tpu_custom_call.1} parent=1 // pred_fallthru
      _
    // Predicated region
    $region22: #{tpu_custom_call.1} parent=1 // pred_check
      _
    $region23: #{tpu_custom_call.1} parent=1 // pred_check_branch
      %63 = sbr.rel (0) target = $region25
    $region24: #{tpu_custom_call.1} parent=1 // pred_region
      %65 = dma.done [#allocation5], 16
    $region25: #{tpu_custom_call.1} parent=1 // pred_fallthru
      _
    %66 = vsyncpa [#allocation4], 1
    %67 = vsyncpa [#allocation5], 1

</llo_original>
